<compile_context>
chip_gen: v7x
topology: tpu7x:2x2x1
jax: 0.10.0
libtpu: 0.0.40
codegen_flags: <defaults>
</compile_context>

<pallas_src>
import functools

import jax
import jax.numpy as jnp
from jax import lax
from jax.experimental import pallas as pl
from jax.experimental.pallas import tpu as pltpu


def _round_up(x, m):
    return ((x + m - 1) // m) * m


def _cdiv(a, b):
    return (a + b - 1) // b


def _vmem_capacity_bytes():
    try:
        return int(pltpu.get_tpu_info().vmem_capacity_bytes)
    except Exception:
        return 64 * 1024 * 1024  # conservative (v7x per-core) fallback


def _num_tensorcores():
    # Heuristic: v7x (and v4 megacore) expose 2 TensorCores behind one device.
    try:
        kind = jax.devices()[0].device_kind.lower()
    except Exception:
        return 1
    return 2 if ("v7" in kind or "v4" in kind) else 1


def _fusion_attention_kernel(q_ref, t_ref, o_ref, qs_ref, m_ref, l_ref, acc_ref, *,
                             scale, n_valid, n_tile, mask_n, compute_dtype):
    # q_ref: (1, Pt, D)  t_ref: (1, Nt, D)  o_ref: (1, Pt, D)
    # qs_ref: (Pt, D) compute_dtype   m_ref/l_ref: (Pt, 1) f32   acc_ref: (Pt, D) f32
    n_idx = pl.program_id(2)

    @pl.when(n_idx == 0)
    def _init():
        # Hoist the scale (and optional bf16 cast) out of the N loop.
        qs_ref[...] = (q_ref[0] * scale).astype(qs_ref.dtype)
        m_ref[...] = jnp.full(m_ref.shape, -jnp.inf, dtype=m_ref.dtype)
        l_ref[...] = jnp.zeros(l_ref.shape, dtype=l_ref.dtype)
        acc_ref[...] = jnp.zeros(acc_ref.shape, dtype=acc_ref.dtype)

    q = qs_ref[...]                              # (Pt, D), already scaled/cast
    t = t_ref[0].astype(compute_dtype)           # (Nt, D)

    if mask_n:  # static: only emitted when N % Nt != 0 (last tile is partial)
        row = n_idx * n_tile + lax.broadcasted_iota(jnp.int32, (t.shape[0], 1), 0)
        row_ok = row < n_valid                   # (Nt, 1)
        # Zero garbage token rows so both matmuls stay NaN/Inf-free.
        t = jnp.where(row_ok, t, jnp.zeros_like(t))

    # scores = q . tokens^T, contraction on D expressed directly (no transpose).
    s = lax.dot_general(q, t,
                        dimension_numbers=(((1,), (1,)), ((), ())),
                        preferred_element_type=jnp.float32)       # (Pt, Nt) f32

    if mask_n:
        col = n_idx * n_tile + lax.broadcasted_iota(jnp.int32, (1, s.shape[1]), 1)
        s = jnp.where(col < n_valid, s, -1e30)   # exp underflows to exactly 0

    # Online softmax update across N tiles.
    m_prev = m_ref[...]
    m_new = jnp.maximum(m_prev, jnp.max(s, axis=-1, keepdims=True))
    alpha = jnp.exp(m_prev - m_new)
    # TODO(synk): on v6e/v7x a bf16 exp roughly doubles EUP throughput if a
    #             looser tolerance is acceptable downstream.
    p = jnp.exp(s - m_new)
    l_ref[...] = alpha * l_ref[...] + jnp.sum(p, axis=-1, keepdims=True)
    acc_ref[...] = alpha * acc_ref[...] + jnp.dot(
        p.astype(compute_dtype), t, preferred_element_type=jnp.float32)
    m_ref[...] = m_new

    @pl.when(n_idx == pl.num_programs(2) - 1)
    def _finalize():
        # Exact reciprocal keeps the strict f32 tolerance; approx=True (EUP
        # slot) is available if a looser tolerance is acceptable.
        inv_l = pl.reciprocal(l_ref[...], approx=False)
        o_ref[0] = (acc_ref[...] * inv_l).astype(o_ref.dtype)


def base_fusion_attention(x_latent, prompts_latent, *, p_tile=256, n_tile=1024,
                          use_bf16_matmul=False):
    """BaseFusionAttention.forward with identity get_query / get_tokens.

    x_latent:       (B, N, D)  tokens
    prompts_latent: (B, P, D)  queries
    returns:        (B, P, D)  context
    """
    B, N, D = x_latent.shape
    Bq, P, Dq = prompts_latent.shape
    assert B == Bq and D == Dq
    scale = float(D) ** (-0.5)
    dtype = prompts_latent.dtype
    itemsize = jnp.dtype(dtype).itemsize
    compute_dtype = jnp.bfloat16 if use_bf16_matmul else dtype
    qs_itemsize = jnp.dtype(compute_dtype).itemsize

    # Sublane multiple depends on dtype packing: f32 -> 8, bf16 -> 16, int8/fp8 -> 32.
    sublane = max(8, 8 * (4 // itemsize))
    Dlane = _round_up(D, 128)  # VMEM lane footprint only; HBM stays unpadded.

    Pt = _round_up(max(1, min(p_tile, P)), sublane)
    Nt = _round_up(max(1, min(n_tile, N)), sublane)

    # v7x (2 TensorCores/chip): make sure the parallel grid extent covers both.
    if _num_tensorcores() >= 2 and B * _cdiv(P, Pt) < 2 and P > sublane:
        Pt = _round_up(_cdiv(P, 2), sublane)

    vmem_budget = int(0.72 * _vmem_capacity_bytes())
    token_bufs = 3 if Dlane <= 256 else 2  # deepen the streamed-token pipeline at small D

    def vmem_need(pt, nt, bufs):
        inputs = (2 * pt + bufs * nt) * Dlane * itemsize       # pipelined blocks
        outputs = 2 * pt * Dlane * itemsize
        scratch = pt * Dlane * 4 + pt * Dlane * qs_itemsize + 2 * pt * 128 * 4
        live = 3 * pt * nt * 4                                 # s, p, temporaries
        return inputs + outputs + scratch + live

    while vmem_need(Pt, Nt, token_bufs) > vmem_budget and (
            token_bufs > 2 or Nt > sublane or Pt > sublane):
        if token_bufs > 2:
            token_bufs = 2
        elif Nt > sublane:
            Nt = max(sublane, _round_up(Nt // 2, sublane))
        else:
            Pt = max(sublane, _round_up(Pt // 2, sublane))

    n_p = _cdiv(P, Pt)
    n_n = _cdiv(N, Nt)
    mask_n = (N % Nt) != 0

    kernel = functools.partial(
        _fusion_attention_kernel,
        scale=scale, n_valid=N, n_tile=Nt, mask_n=mask_n,
        compute_dtype=compute_dtype)

    cost = pl.CostEstimate(
        flops=4 * B * P * N * D,                         # two matmuls
        transcendentals=B * P * N,                       # softmax exp
        # tokens are re-read once per P tile
        bytes_accessed=(B * N * D * n_p + 2 * B * P * D) * itemsize,
    )

    def _token_spec(bufs):
        tok_map = lambda b, p, n: (b, n, 0)
        if bufs > 2:
            try:
                return pl.BlockSpec((1, Nt, D), tok_map,
                                    pipeline_mode=pl.Buffered(bufs))
            except TypeError:
                pass
        return pl.BlockSpec((1, Nt, D), tok_map)

    def _invoke(bufs):
        return pl.pallas_call(
            kernel,
            out_shape=jax.ShapeDtypeStruct((B, P, D), dtype),
            grid_spec=pltpu.PrefetchScalarGridSpec(
                num_scalar_prefetch=0,
                grid=(B, n_p, n_n),                      # N reduction innermost
                in_specs=[
                    pl.BlockSpec((1, Pt, D), lambda b, p, n: (b, p, 0)),  # queries
                    _token_spec(bufs),                                    # tokens
                ],
                out_specs=pl.BlockSpec((1, Pt, D), lambda b, p, n: (b, p, 0)),
                scratch_shapes=[
                    pltpu.VMEM((Pt, D), compute_dtype),   # scaled (+cast) q
                    pltpu.VMEM((Pt, 1), jnp.float32),     # running max  m
                    pltpu.VMEM((Pt, 1), jnp.float32),     # running sum  l
                    pltpu.VMEM((Pt, D), jnp.float32),     # f32 context accumulator
                ],
            ),
            compiler_params=pltpu.CompilerParams(
                dimension_semantics=("parallel", "parallel", "arbitrary"),
                vmem_limit_bytes=vmem_budget,
            ),
            cost_estimate=cost,
        )(prompts_latent, x_latent)

    if token_bufs > 2:
        try:
            return _invoke(token_bufs)
        except Exception:
            # Deep buffering unsupported on this jax/Mosaic build -> default depth.
            return _invoke(2)
    return _invoke(2)


def _reference(x_latent, prompts_latent):
    D = x_latent.shape[-1]
    scale = float(D) ** (-0.5)
    s = jnp.einsum("bpd,bnd->bpn", prompts_latent, x_latent) * scale
    w = jax.nn.softmax(s, axis=-1)
    return jnp.einsum("bpn,bnd->bpd", w, x_latent)


if __name__ == "__main__":
    key = jax.random.PRNGKey(0)
    k1, k2, k3, k4, k5, k6 = jax.random.split(key, 6)

    # Config 1: small shapes (D=32 < 128 lane width, partial N tile masking).
    B, N, P, D = 2, 20, 8, 32
    x1 = jax.random.normal(k1, (B, N, D), dtype=jnp.float32)
    q1 = jax.random.normal(k2, (B, P, D), dtype=jnp.float32)
    o1 = jax.block_until_ready(base_fusion_attention(x1, q1))
    r1 = _reference(x1, q1)
    assert o1.shape == (B, P, D)
    assert jnp.allclose(o1, r1, atol=2e-5, rtol=2e-5), (
        f"config1 max abs err {jnp.max(jnp.abs(o1 - r1))}")

    # Config 2: multiple P tiles + multi-step online-softmax reduction over N
    # tiles, with partial (masked) last tiles in both P and N.
    B2, N2, P2, D2 = 2, 300, 40, 32
    x2 = jax.random.normal(k3, (B2, N2, D2), dtype=jnp.float32)
    q2 = jax.random.normal(k4, (B2, P2, D2), dtype=jnp.float32)
    o2 = jax.block_until_ready(
        base_fusion_attention(x2, q2, p_tile=16, n_tile=128))
    r2 = _reference(x2, q2)
    assert o2.shape == (B2, P2, D2)
    assert jnp.allclose(o2, r2, atol=2e-5, rtol=2e-5), (
        f"config2 max abs err {jnp.max(jnp.abs(o2 - r2))}")

    # Config 3: B=1 (exercises the 2-TensorCore P split on v7x), lane-aligned D,
    # exactly divisible N (no-mask fast path).
    B3, N3, P3, D3 = 1, 256, 64, 128
    x3 = jax.random.normal(k5, (B3, N3, D3), dtype=jnp.float32)
    q3 = jax.random.normal(k6, (B3, P3, D3), dtype=jnp.float32)
    o3 = jax.block_until_ready(base_fusion_attention(x3, q3, n_tile=128))
    r3 = _reference(x3, q3)
    assert o3.shape == (B3, P3, D3)
    assert jnp.allclose(o3, r3, atol=2e-5, rtol=2e-5), (
        f"config3 max abs err {jnp.max(jnp.abs(o3 - r3))}")

    # Config 4: bf16 MXU operand path (looser tolerance; essential on v5e).
    o4 = jax.block_until_ready(
        base_fusion_attention(x2, q2, p_tile=16, n_tile=128,
                              use_bf16_matmul=True))
    assert o4.shape == (B2, P2, D2)
    assert jnp.allclose(o4, r2, atol=5e-2, rtol=5e-2), (
        f"config4 (bf16) max abs err {jnp.max(jnp.abs(o4 - r2))}")

    print("KERNEL_OK")
</pallas_src>

<mosaic_0001>
module attributes {stable_mosaic.version = 11 : i64} {
  func.func @_fusion_attention_kernel(%arg0: i32, %arg1: i32, %arg2: i32, %arg3: memref<1x8x32xf32, #tpu.memory_space<vmem>>, %arg4: memref<1x24x32xf32, #tpu.memory_space<vmem>>, %arg5: memref<1x8x32xf32, #tpu.memory_space<vmem>>, %arg6: memref<8x32xf32, #tpu.memory_space<vmem>>, %arg7: memref<8x1xf32, #tpu.memory_space<vmem>>, %arg8: memref<8x1xf32, #tpu.memory_space<vmem>>, %arg9: memref<8x32xf32, #tpu.memory_space<vmem>>) attributes {dimension_semantics = [#tpu.dimension_semantics<parallel>, #tpu.dimension_semantics<parallel>, #tpu.dimension_semantics<arbitrary>], iteration_bounds = array<i64: 2, 1, 1>, scalar_prefetch = 0 : i64, scratch_operands = 4 : i64, tpu.core_type = #tpu.core_type<tc>, window_params = [{transform_indices = @transform_0, window_bounds = array<i64: 1, 8, 32>}, {transform_indices = @transform_1, window_bounds = array<i64: 1, 24, 32>}, {transform_indices = @transform_2, window_bounds = array<i64: 1, 8, 32>}]} {
    %c0_i32 = arith.constant 0 : i32
    %0 = arith.cmpi eq, %arg2, %c0_i32 : i32
    %1 = arith.extui %0 : i1 to i32
    %c0_i32_0 = arith.constant 0 : i32
    %2 = arith.cmpi ne, %1, %c0_i32_0 : i32
    scf.if %2 {
      %c0_26 = arith.constant 0 : index
      %c0_27 = arith.constant 0 : index
      %c0_28 = arith.constant 0 : index
      %52 = vector.load %arg3[%c0_26, %c0_27, %c0_28] : memref<1x8x32xf32, #tpu.memory_space<vmem>>, vector<1x8x32xf32>
      %53 = vector.shape_cast %52 : vector<1x8x32xf32> to vector<8x32xf32>
      %cst_29 = arith.constant 0.176776692 : f32
      %54 = vector.broadcast %cst_29 : f32 to vector<8x32xf32>
      %55 = arith.mulf %53, %54 : vector<8x32xf32>
      %c0_30 = arith.constant 0 : index
      %c0_31 = arith.constant 0 : index
      %56 = vector.load %arg6[%c0_30, %c0_31] : memref<8x32xf32, #tpu.memory_space<vmem>>, vector<8x32xf32>
      tpu.vector_store %arg6[%c0_30, %c0_31], %55 {strides = array<i32>} : memref<8x32xf32, #tpu.memory_space<vmem>>, vector<8x32xf32>,
      %cst_32 = arith.constant 0xFF800000 : f32
      %57 = vector.broadcast %cst_32 : f32 to vector<8x1xf32>
      %c0_33 = arith.constant 0 : index
      %c0_34 = arith.constant 0 : index
      %58 = vector.load %arg7[%c0_33, %c0_34] : memref<8x1xf32, #tpu.memory_space<vmem>>, vector<8x1xf32>
      tpu.vector_store %arg7[%c0_33, %c0_34], %57 {strides = array<i32>} : memref<8x1xf32, #tpu.memory_space<vmem>>, vector<8x1xf32>,
      %cst_35 = arith.constant 0.000000e+00 : f32
      %59 = vector.broadcast %cst_35 : f32 to vector<8x1xf32>
      %c0_36 = arith.constant 0 : index
      %c0_37 = arith.constant 0 : index
      %60 = vector.load %arg8[%c0_36, %c0_37] : memref<8x1xf32, #tpu.memory_space<vmem>>, vector<8x1xf32>
      tpu.vector_store %arg8[%c0_36, %c0_37], %59 {strides = array<i32>} : memref<8x1xf32, #tpu.memory_space<vmem>>, vector<8x1xf32>,
      %cst_38 = arith.constant 0.000000e+00 : f32
      %61 = vector.broadcast %cst_38 : f32 to vector<8x32xf32>
      %c0_39 = arith.constant 0 : index
      %c0_40 = arith.constant 0 : index
      %62 = vector.load %arg9[%c0_39, %c0_40] : memref<8x32xf32, #tpu.memory_space<vmem>>, vector<8x32xf32>
      tpu.vector_store %arg9[%c0_39, %c0_40], %61 {strides = array<i32>} : memref<8x32xf32, #tpu.memory_space<vmem>>, vector<8x32xf32>,
    } else {
    }
    %c0 = arith.constant 0 : index
    %c0_1 = arith.constant 0 : index
    %3 = vector.load %arg6[%c0, %c0_1] : memref<8x32xf32, #tpu.memory_space<vmem>>, vector<8x32xf32>
    %c0_2 = arith.constant 0 : index
    %c0_3 = arith.constant 0 : index
    %c0_4 = arith.constant 0 : index
    %4 = vector.load %arg4[%c0_2, %c0_3, %c0_4] : memref<1x24x32xf32, #tpu.memory_space<vmem>>, vector<1x24x32xf32>
    %5 = vector.shape_cast %4 : vector<1x24x32xf32> to vector<24x32xf32>
    %c24_i32 = arith.constant 24 : i32
    %6 = arith.muli %arg2, %c24_i32 : i32
    %7 = tpu.iota {dimensions = array<i32: 0>} : vector<24x1xi32>
    %8 = vector.broadcast %6 : i32 to vector<24x1xi32>
    %9 = arith.addi %8, %7 : vector<24x1xi32>
    %c20_i32 = arith.constant 20 : i32
    %10 = vector.broadcast %c20_i32 : i32 to vector<24x1xi32>
    %11 = arith.cmpi slt, %9, %10 : vector<24x1xi32>
    %cst = arith.constant 0.000000e+00 : f32
    %12 = vector.broadcast %cst : f32 to vector<24x32xf32>
    %13 = vector.shape_cast %11 : vector<24x1xi1> to vector<24x1xi1>
    %14 = vector.broadcast %13 : vector<24x1xi1> to vector<24x32xi1>
    %15 = arith.select %14, %5, %12 : vector<24x32xi1>, vector<24x32xf32>
    %cst_5 = arith.constant dense<0.000000e+00> : vector<8x24xf32>
    %16 = tpu.matmul %3, %15, %cst_5 {dimension_numbers = #tpu.dot_dimension_numbers<[1], [1], [0], [0], [0, 0, 1, 0], [], []>} : vector<8x32xf32>, vector<24x32xf32>, vector<8x24xf32> -> vector<8x24xf32>
    %c24_i32_6 = arith.constant 24 : i32
    %17 = arith.muli %arg2, %c24_i32_6 : i32
    %18 = tpu.iota {dimensions = array<i32: 1>} : vector<1x24xi32>
    %19 = vector.broadcast %17 : i32 to vector<1x24xi32>
    %20 = arith.addi %19, %18 : vector<1x24xi32>
    %c20_i32_7 = arith.constant 20 : i32
    %21 = vector.broadcast %c20_i32_7 : i32 to vector<1x24xi32>
    %22 = arith.cmpi slt, %20, %21 : vector<1x24xi32>
    %cst_8 = arith.constant -1.000000e+30 : f32
    %23 = vector.shape_cast %22 : vector<1x24xi1> to vector<1x24xi1>
    %24 = vector.broadcast %23 : vector<1x24xi1> to vector<8x24xi1>
    %25 = vector.broadcast %cst_8 : f32 to vector<8x24xf32>
    %26 = arith.select %24, %16, %25 : vector<8x24xi1>, vector<8x24xf32>
    %c0_9 = arith.constant 0 : index
    %c0_10 = arith.constant 0 : index
    %27 = vector.load %arg7[%c0_9, %c0_10] : memref<8x1xf32, #tpu.memory_space<vmem>>, vector<8x1xf32>
    %cst_11 = arith.constant dense<0xFF800000> : vector<8xf32>
    %28 = vector.multi_reduction <maximumf>, %26, %cst_11 [1] : vector<8x24xf32> to vector<8xf32>
    %29 = vector.shape_cast %28 : vector<8xf32> to vector<8x1xf32>
    %30 = arith.maximumf %27, %29 : vector<8x1xf32>
    %31 = arith.subf %27, %30 : vector<8x1xf32>
    %32 = math.exp %31 : vector<8x1xf32>
    %33 = vector.broadcast %30 : vector<8x1xf32> to vector<8x24xf32>
    %34 = arith.subf %26, %33 : vector<8x24xf32>
    %35 = math.exp %34 : vector<8x24xf32>
    %c0_12 = arith.constant 0 : index
    %c0_13 = arith.constant 0 : index
    %36 = vector.load %arg8[%c0_12, %c0_13] : memref<8x1xf32, #tpu.memory_space<vmem>>, vector<8x1xf32>
    %37 = arith.mulf %32, %36 : vector<8x1xf32>
    %cst_14 = arith.constant dense<0.000000e+00> : vector<8xf32>
    %38 = vector.multi_reduction <add>, %35, %cst_14 [1] : vector<8x24xf32> to vector<8xf32>
    %39 = vector.shape_cast %38 : vector<8xf32> to vector<8x1xf32>
    %40 = arith.addf %37, %39 : vector<8x1xf32>
    %c0_15 = arith.constant 0 : index
    %c0_16 = arith.constant 0 : index
    %41 = vector.load %arg8[%c0_15, %c0_16] : memref<8x1xf32, #tpu.memory_space<vmem>>, vector<8x1xf32>
    tpu.vector_store %arg8[%c0_15, %c0_16], %40 {strides = array<i32>} : memref<8x1xf32, #tpu.memory_space<vmem>>, vector<8x1xf32>,
    %c0_17 = arith.constant 0 : index
    %c0_18 = arith.constant 0 : index
    %42 = vector.load %arg9[%c0_17, %c0_18] : memref<8x32xf32, #tpu.memory_space<vmem>>, vector<8x32xf32>
    %43 = vector.broadcast %32 : vector<8x1xf32> to vector<8x32xf32>
    %44 = arith.mulf %43, %42 : vector<8x32xf32>
    %cst_19 = arith.constant dense<0.000000e+00> : vector<8x32xf32>
    %45 = tpu.matmul %35, %15, %cst_19 {dimension_numbers = #tpu.dot_dimension_numbers<[1], [0], [0], [1], [0, 0, 1, 1], [], []>} : vector<8x24xf32>, vector<24x32xf32>, vector<8x32xf32> -> vector<8x32xf32>
    %46 = arith.addf %44, %45 : vector<8x32xf32>
    %c0_20 = arith.constant 0 : index
    %c0_21 = arith.constant 0 : index
    %47 = vector.load %arg9[%c0_20, %c0_21] : memref<8x32xf32, #tpu.memory_space<vmem>>, vector<8x32xf32>
    tpu.vector_store %arg9[%c0_20, %c0_21], %46 {strides = array<i32>} : memref<8x32xf32, #tpu.memory_space<vmem>>, vector<8x32xf32>,
    %c0_22 = arith.constant 0 : index
    %c0_23 = arith.constant 0 : index
    %48 = vector.load %arg7[%c0_22, %c0_23] : memref<8x1xf32, #tpu.memory_space<vmem>>, vector<8x1xf32>
    tpu.vector_store %arg7[%c0_22, %c0_23], %30 {strides = array<i32>} : memref<8x1xf32, #tpu.memory_space<vmem>>, vector<8x1xf32>,
    %c0_i32_24 = arith.constant 0 : i32
    %49 = arith.cmpi eq, %arg2, %c0_i32_24 : i32
    %50 = arith.extui %49 : i1 to i32
    %c0_i32_25 = arith.constant 0 : i32
    %51 = arith.cmpi ne, %50, %c0_i32_25 : i32
    scf.if %51 {
      %c0_26 = arith.constant 0 : index
      %c0_27 = arith.constant 0 : index
      %52 = vector.load %arg8[%c0_26, %c0_27] : memref<8x1xf32, #tpu.memory_space<vmem>>, vector<8x1xf32>
      %53 = tpu.reciprocal %52 : vector<8x1xf32> -> vector<8x1xf32>
      %c0_28 = arith.constant 0 : index
      %c0_29 = arith.constant 0 : index
      %54 = vector.load %arg9[%c0_28, %c0_29] : memref<8x32xf32, #tpu.memory_space<vmem>>, vector<8x32xf32>
      %55 = vector.broadcast %53 : vector<8x1xf32> to vector<8x32xf32>
      %56 = arith.mulf %54, %55 : vector<8x32xf32>
      %c0_30 = arith.constant 0 : index
      %c0_31 = arith.constant 0 : index
      %c0_32 = arith.constant 0 : index
      %57 = vector.load %arg5[%c0_30, %c0_31, %c0_32] : memref<1x8x32xf32, #tpu.memory_space<vmem>>, vector<1x8x32xf32>
      %58 = vector.shape_cast %57 : vector<1x8x32xf32> to vector<8x32xf32>
      %59 = vector.shape_cast %56 : vector<8x32xf32> to vector<1x8x32xf32>
      tpu.vector_store %arg5[%c0_30, %c0_31, %c0_32], %59 {strides = array<i32>} : memref<1x8x32xf32, #tpu.memory_space<vmem>>, vector<1x8x32xf32>,
    } else {
    }
    return
  }
  func.func @transform_0(%arg0: i32, %arg1: i32, %arg2: i32) -> (i32, i32, i32) {
    %c0_i32 = arith.constant 0 : i32
    %c0_i32_0 = arith.constant 0 : i32
    return %arg0, %arg1, %c0_i32 : i32, i32, i32
  }
  func.func @transform_1(%arg0: i32, %arg1: i32, %arg2: i32) -> (i32, i32, i32) {
    %c0_i32 = arith.constant 0 : i32
    %c0_i32_0 = arith.constant 0 : i32
    return %arg0, %arg2, %c0_i32 : i32, i32, i32
  }
  func.func @transform_2(%arg0: i32, %arg1: i32, %arg2: i32) -> (i32, i32, i32) {
    %c0_i32 = arith.constant 0 : i32
    %c0_i32_0 = arith.constant 0 : i32
    return %arg0, %arg1, %c0_i32 : i32, i32, i32
  }
}

</mosaic_0001>

<llo_original>
// kernel: tpu_custom_call.1
$region0: #{tpu_custom_call.1}
  #allocation0 [shape = 'u32[]', space=smem, size = 0x4, offset = 0x4, fixed_abs, tag = 'smem constant byte address 0x4 - core index']
  #allocation1 [shape = 'u32[144,128]{1,0:T(1,128)}', space=vmem, size = 0x12000, scoped, tag = 'internal scratch']
  #allocation2 [shape = 'f32[8,32]{1,0:T(8,128)}', space=vmem, size = 0x1000, scoped, tag = 'scratch operand']
  #allocation3 [shape = 'f32[8,1]{1,0:T(8,128)}', space=vmem, size = 0x1000, scoped, tag = 'scratch operand']
  #allocation4 [shape = 'f32[8,1]{1,0:T(8,128)}', space=vmem, size = 0x1000, scoped, tag = 'scratch operand']
  #allocation5 [shape = 'f32[8,32]{1,0:T(8,128)}', space=vmem, size = 0x1000, scoped, tag = 'scratch operand']
  %s0 = inlined_call_operand.vmem [shape: f32[2,8,32], index: 0, kind: input, shape index: {}]
  %s1 = inlined_call_operand.vmem [shape: f32[2,20,32], index: 1, kind: input, shape index: {}]
  %s2 = inlined_call_operand.hbm [shape: f32[2,8,32], index: 2, kind: output, shape index: {}]
  %s3 = sld [smem:[#allocation0]]
  $region49: #{tpu_custom_call.1} parent=0
    _
  %s5 = ssub.s32 1, %s3
  %s6 = scalar_select 0, %s5, %s3
  $region1: #{tpu_custom_call.1} parent=0
    #allocation6 [shape = 'u8[8192]{0}', space=vmem, size = 0x2000, scoped, tag = 'output window, operand 0']
    #allocation7 [shape = 's32[2]{0}', space=sflag, size = 0x8, scoped, tag = 'scoped memory for tpu_custom_call.1']
    %7 = vsyncpa [#allocation7], 0
    %s8 = scalar_lea.sflag [#allocation7], 1
    %9 = vsyncpa %s8, 0
    loop: start=0, step=1, limit=4
    $region2: #{tpu_custom_call.1} parent=1 // loop_pre_header
      _
    $region3: #{tpu_custom_call.1} parent=1 // loop_header
      %s11 = sphi 0, %s15
      %p12 = scmp.ge.s32.totalorder %s11, 4
      %s18 = sphi 0, %s37
      %s19 = sphi 0, %s33
      %s20 = sphi 0, %s29
      %s21 = sphi 0, %s18
      %s22 = sphi 0, %s19
      %s23 = sphi 0, %s20
      %s24 = sphi 0, %s21
      %s25 = sphi 0, %s22
      %s26 = sphi 0, %s23
      %s42 = sphi 0, %s44
      %s45 = sphi 0, %s42
      %s46 = sphi 0, %s45
      %s62 = sphi 0, %s46
      %s70 = sphi 0, %s72
      %s73 = sphi 0, %s70
      %s74 = sphi 0, %s73
      %s90 = sphi 0, %s74
      %s98 = sphi 0, %s100
      %s101 = sphi 0, %s98
      %s102 = sphi 0, %s101
      %s118 = sphi 0, %s102
    $region4: #{tpu_custom_call.1} parent=1 // loop_header_branch
      %14 = sbr.rel (%p12) target = $region8
    $region5: #{tpu_custom_call.1} parent=1 // loop_body
      %s16 = ssub.s32 %s11, 1
      %s17 = ssub.s32 %s11, 2
      %s27 = sadd.s32 1, %s20
      %p28 = scmp.ge.s32.totalorder %s27, 1
      %s29 = scalar_select %p28, 0, %s27
      %s30 = sadd.s32 1, %s19
      %s31 = scalar_select %p28, %s30, %s19
      %p32 = scmp.ge.s32.totalorder %s31, 1
      %s33 = scalar_select %p32, 0, %s31
      %s34 = sadd.s32 1, %s18
      %s35 = scalar_select %p32, %s34, %s18
      %p36 = scmp.ge.s32.totalorder %s35, 2
      %s37 = scalar_select %p36, 0, %s35
      %s38 = ssub.s32 %s18, %s37
      %s39 = ssub.s32 %s19, %s33
      %s40 = sor.u32 %s38, %s39
      %p41 = scmp.eq.s32.totalorder %s40, 0
      %s43 = sadd.s32 %s42, 1
      %s44 = scalar_select %p41, %s42, %s43
      %p47 = pneg %p41
      %p48 = scmp.eq.s32.totalorder %s11, 1
      %p49 = por %p47, %p48
      %p50 = scmp.ne.s32.totalorder %s42, %s45
      %p51 = scmp.eq.s32.totalorder %s11, 0
      %p52 = por %p50, %p51
      %p53 = scmp.ne.s32.totalorder %s42, %s45
      %p54 = scmp.eq.s32.totalorder %s16, 1
      %p55 = por %p53, %p54
      %p56 = scmp.ne.s32.totalorder %s45, %s46
      %p57 = scmp.eq.s32.totalorder %s16, 0
      %p58 = por %p56, %p57
      %p59 = scmp.ne.s32.totalorder %s45, %s46
      %p60 = scmp.eq.s32.totalorder %s17, 1
      %p61 = por %p59, %p60
      %p63 = scmp.ne.s32.totalorder %s46, %s62
      %p64 = scmp.eq.s32.totalorder %s17, 0
      %p65 = por %p63, %p64
      %s66 = ssub.s32 %s18, %s37
      %s67 = ssub.s32 %s20, %s29
      %s68 = sor.u32 %s66, %s67
      %p69 = scmp.eq.s32.totalorder %s68, 0
      %s71 = sadd.s32 %s70, 1
      %s72 = scalar_select %p69, %s70, %s71
      %p75 = pneg %p69
      %p76 = scmp.eq.s32.totalorder %s11, 1
      %p77 = por %p75, %p76
      %p78 = scmp.ne.s32.totalorder %s70, %s73
      %p79 = scmp.eq.s32.totalorder %s11, 0
      %p80 = por %p78, %p79
      %p81 = scmp.ne.s32.totalorder %s70, %s73
      %p82 = scmp.eq.s32.totalorder %s16, 1
      %p83 = por %p81, %p82
      %p84 = scmp.ne.s32.totalorder %s73, %s74
      %p85 = scmp.eq.s32.totalorder %s16, 0
      %p86 = por %p84, %p85
      %p87 = scmp.ne.s32.totalorder %s73, %s74
      %p88 = scmp.eq.s32.totalorder %s17, 1
      %p89 = por %p87, %p88
      %p91 = scmp.ne.s32.totalorder %s74, %s90
      %p92 = scmp.eq.s32.totalorder %s17, 0
      %p93 = por %p91, %p92
      %s94 = ssub.s32 %s18, %s37
      %s95 = ssub.s32 %s19, %s33
      %s96 = sor.u32 %s94, %s95
      %p97 = scmp.eq.s32.totalorder %s96, 0
      %s99 = sadd.s32 %s98, 1
      %s100 = scalar_select %p97, %s98, %s99
      %p103 = pneg %p97
      %p104 = scmp.eq.s32.totalorder %s11, 1
      %p105 = por %p103, %p104
      %p106 = scmp.ne.s32.totalorder %s98, %s101
      %p107 = scmp.eq.s32.totalorder %s11, 0
      %p108 = por %p106, %p107
      %p109 = scmp.ne.s32.totalorder %s98, %s101
      %p110 = scmp.eq.s32.totalorder %s16, 1
      %p111 = por %p109, %p110
      %p112 = scmp.ne.s32.totalorder %s101, %s102
      %p113 = scmp.eq.s32.totalorder %s16, 0
      %p114 = por %p112, %p113
      %p115 = scmp.ne.s32.totalorder %s101, %s102
      %p116 = scmp.eq.s32.totalorder %s17, 1
      %p117 = por %p115, %p116
      %p119 = scmp.ne.s32.totalorder %s102, %s118
      %p120 = scmp.eq.s32.totalorder %s17, 0
      %p121 = por %p119, %p120
      %p122 = scmp.le.s32.totalorder 1, %s11
      %p123 = scmp.lt.s32.totalorder %s11, 3
      %p124 = pnand %p122, %p123
      %p125 = pneg %p124
      // Predicated region
      $region9: #{tpu_custom_call.1} parent=5 // pred_check
        _
      $region10: #{tpu_custom_call.1} parent=5 // pred_check_branch
        %127 = sbr.rel (%p124) target = $region12
      $region11: #{tpu_custom_call.1} parent=5 // pred_region
        %s128 = ssub.s32 %s11, 1
      $region12: #{tpu_custom_call.1} parent=5 // pred_fallthru
        _
      %p129 = scmp.lt.s32.totalorder %s11, 2
      // Predicated region
      $region13: #{tpu_custom_call.1} parent=5 // pred_check
        %p130 = pneg %p129
      $region14: #{tpu_custom_call.1} parent=5 // pred_check_branch
        %132 = sbr.rel (%p130) target = $region16
      $region15: #{tpu_custom_call.1} parent=5 // pred_region
        // Predicated region
        $region17: #{tpu_custom_call.1} parent=15 // pred_check
          %p133 = pneg %p52
        $region18: #{tpu_custom_call.1} parent=15 // pred_check_branch
          %135 = sbr.rel (%p133) target = $region20
        $region19: #{tpu_custom_call.1} parent=15 // pred_region
          %p136 = scmp.lt.s32.totalorder %s18, 1
          %s137 = scalar_select %p136, %s18, 1
          %p138 = scmp.lt.s32.totalorder %s19, 0
          %s139 = scalar_select %p138, %s19, 0
          %s140 = sadd.s32 %s139, %s137
          %s141 = smul.addr %s140, 8
          %s142 = scalar_lea.vmem %s0, %s141
        $region20: #{tpu_custom_call.1} parent=15 // pred_fallthru
          _
        // Predicated region
        $region21: #{tpu_custom_call.1} parent=15 // pred_check
          %p143 = pneg %p80
        $region22: #{tpu_custom_call.1} parent=15 // pred_check_branch
          %145 = sbr.rel (%p143) target = $region24
        $region23: #{tpu_custom_call.1} parent=15 // pred_region
          %s146 = smul.u32 3, %s20
          %p147 = scmp.lt.s32.totalorder %s18, 1
          %s148 = scalar_select %p147, %s18, 1
          %p149 = scmp.lt.s32.totalorder %s146, 2
          %s150 = scalar_select %p149, %s146, 2
          %s151 = smul.addr %s148, 3
          %s152 = sadd.s32 %s150, %s151
          %s153 = smul.addr %s152, 8
          %s154 = scalar_lea.vmem %s1, %s153
          %s155 = smul.u32 3, %s20
        $region24: #{tpu_custom_call.1} parent=15 // pred_fallthru
          _
      $region16: #{tpu_custom_call.1} parent=5 // pred_fallthru
        _
      %p156 = scmp.le.s32.totalorder 1, %s11
      %p157 = scmp.lt.s32.totalorder %s11, 3
      %p158 = pnand %p156, %p157
      %p159 = pneg %p158
      // Predicated region
      $region25: #{tpu_custom_call.1} parent=5 // pred_check
        _
      $region26: #{tpu_custom_call.1} parent=5 // pred_check_branch
        %161 = sbr.rel (%p158) target = $region28
      $region27: #{tpu_custom_call.1} parent=5 // pred_region
        %s162 = ssub.s32 %s11, 1
        %p163 = scmp.lt.s32.totalorder %s21, 1
        %s164 = scalar_select %p163, %s21, 1
        %p165 = scmp.lt.s32.totalorder %s22, 0
        %s166 = scalar_select %p165, %s22, 0
        %s167 = sadd.s32 %s166, %s164
        %s168 = smul.addr %s167, 8
        %s169 = scalar_lea.vmem %s0, %s168
        %p170 = pneg %p58
        %p171 = pneg %p55
        %s172 = smul.u32 3, %s23
        %p173 = scmp.lt.s32.totalorder %s21, 1
        %s174 = scalar_select %p173, %s21, 1
        %p175 = scmp.lt.s32.totalorder %s172, 2
        %s176 = scalar_select %p175, %s172, 2
        %s177 = smul.addr %s174, 3
        %s178 = sadd.s32 %s176, %s177
        %s179 = smul.addr %s178, 8
        %s180 = scalar_lea.vmem %s1, %s179
        %p181 = pneg %p86
        %p182 = pneg %p83
        %p183 = pneg %p114
        %p184 = pneg %p111
        %s185 = sand.u32 %s101, 1
        %s186 = scalar_lea.sflag [#allocation7], %s185
        %s187 = sand.u32 %s101, 1
        %s188 = smul.addr %s187, 8
        %s189 = scalar_lea.vmem [#allocation6], %s188
        %p190 = scmp.lt.s32.totalorder %s21, 1
        %s191 = scalar_select %p190, %s21, 1
        %p192 = scmp.lt.s32.totalorder %s22, 0
        %s193 = scalar_select %p192, %s22, 0
        %s194 = sadd.s32 %s193, %s191
        %s195 = smul.addr %s194, 8
        %s196 = scalar_lea.vmem %s0, %s195
        %s197 = smul.u32 3, %s23
        %p198 = scmp.lt.s32.totalorder %s21, 1
        %s199 = scalar_select %p198, %s21, 1
        %p200 = scmp.lt.s32.totalorder %s197, 2
        %s201 = scalar_select %p200, %s197, 2
        %s202 = smul.addr %s199, 3
        %s203 = sadd.s32 %s201, %s202
        %s204 = smul.addr %s203, 8
        %s205 = scalar_lea.vmem %s1, %s204
        %s206 = smul.u32 3, %s23
        %p207 = scmp.eq.s32.totalorder %s23, 0
        // Predicated region
        $region29: #{tpu_custom_call.1} parent=27 // pred_check
          %p208 = pneg %p207
        $region30: #{tpu_custom_call.1} parent=27 // pred_check_branch
          %210 = sbr.rel (%p208) target = $region32
        $region31: #{tpu_custom_call.1} parent=27 // pred_region
          %v211 = vld [vmem:[%s196] sm:$0xff]
          %v212 = vmul.f32 %v211, 0.17677669
          %vm213 = vcmask 261120
          %214 = vst.msk [vmem:[#allocation2] sm:$0xff] %vm213, %v212
          %vm215 = vcmask 7168
          %216 = vst.msk [vmem:[#allocation3] sm:$0xff] %vm215, -inf
          %217 = vst.msk [vmem:[#allocation4] sm:$0xff] %vm215, 0.0
          %218 = vst.msk [vmem:[#allocation5] sm:$0xff] %vm213, 0.0
        $region32: #{tpu_custom_call.1} parent=27 // pred_fallthru
          _
        %v219 = vld [vmem:[#allocation2] sm:$0xff]
        %v220 = vld [vmem:[%s205] sm:$0xff]
        %v221 = vld [vmem:[%s205 + $0x8] sm:$0xff]
        %v222 = vld [vmem:[%s205 + $0x10] sm:$0xff]
        %s223 = smul.u32 %s23, 24
        %v224 = vlaneseq
        %v225 = vshrl.u32 %v224, 7
        %v226 = vadd.s32 %v225, 8
        %v227 = vadd.s32 %v225, 16
        %v228 = vstv %s223
        %v229 = vadd.s32 %v228, %v225
        %v230 = vadd.s32 %v228, %v226
        %v231 = vadd.s32 %v228, %v227
        %vm232 = vcmp.lt.s32.totalorder %v229, 20
        %vm233 = vcmp.lt.s32.totalorder %v230, 20
        %vm234 = vcmp.lt.s32.totalorder %v231, 20
        %v235 = vsel %vm232, 1, 0
        %v236 = vsel %vm233, 1, 0
        %v237 = vsel %vm234, 1, 0
        %vm238 = vcmp.eq.s32.totalorder %v235, 1
        %vm239 = vcmp.eq.s32.totalorder %v236, 1
        %vm240 = vcmp.eq.s32.totalorder %v237, 1
        %v241 = vsel %vm238, %v220, 0.0
        %v242 = vsel %vm239, %v221, 0.0
        %v243 = vsel %vm240, %v222, 0.0
        %vm244 = vcmask 261120
        %v246 = vsel %vm244, %v219, 0
        %v249 = vsel %vm244, %v241, 0
        %v252 = vsel %vm244, %v242, 0
        %v255 = vsel %vm244, %v243, 0
        %257 = vmatprep.subr.mxu0 0.0
        %258 = vmatpush1.xpose.msra.mxu0 %v249
        %259 = vmatprep.subr.mxu0 0.0
        %260 = vmatpush1.xpose.msra.mxu0 %v252
        %261 = vmatprep.subr.mxu0 0.0
        %262 = vmatpush1.xpose.msra.mxu0 %v255
        %263 = vmatprep.subr.mxu0 0.0
        %264 = vmatpush1.xpose.msra.mxu0 0.0
        %265 = vmatprep.subr.mxu0 0.0
        %266 = vmatpush1.xpose.msra.mxu0 0.0
        %267 = vmatprep.subr.mxu0 0.0
        %268 = vmatpush1.xpose.msra.mxu0 0.0
        %269 = vmatprep.subr.mxu0 0.0
        %270 = vmatpush1.xpose.msra.mxu0 0.0
        %271 = vmatprep.subr.mxu0 0.0
        %272 = vmatpush1.xpose.msra.mxu0 0.0
        %273 = vmatprep.subr.mxu0 0.0
        %274 = vmatpush1.xpose.msra.mxu0 0.0
        %275 = vmatprep.subr.mxu0 0.0
        %276 = vmatpush1.xpose.msra.mxu0 0.0
        %277 = vmatprep.subr.mxu0 0.0
        %278 = vmatpush1.xpose.msra.mxu0 0.0
        %279 = vmatprep.subr.mxu0 0.0
        %280 = vmatpush1.xpose.msra.mxu0 0.0
        %281 = vmatprep.subr.mxu0 0.0
        %282 = vmatpush1.xpose.msra.mxu0 0.0
        %283 = vmatprep.subr.mxu0 0.0
        %284 = vmatpush1.xpose.msra.mxu0 0.0
        %285 = vmatprep.subr.mxu0 0.0
        %286 = vmatpush1.xpose.msra.mxu0 0.0
        %287 = vmatprep.subr.mxu0 0.0
        %288 = vmatpush1.xpose.msra.mxu0 0.0
        %289 = vmatprep.subr.mxu0 0.0
        %290 = vmatpush1.xpose.msra.mxu0 0.0
        %291 = vmatprep.subr.mxu0 0.0
        %292 = vmatpush1.xpose.msra.mxu0 0.0
        %293 = vmatprep.subr.mxu0 0.0
        %294 = vmatpush1.xpose.msra.mxu0 0.0
        %295 = vmatprep.subr.mxu0 0.0
        %296 = vmatpush1.xpose.msra.mxu0 0.0
        %297 = vmatprep.subr.mxu0 0.0
        %298 = vmatpush1.xpose.msra.mxu0 0.0
        %299 = vmatprep.subr.mxu0 0.0
        %300 = vmatpush1.xpose.msra.mxu0 0.0
        %301 = vmatprep.subr.mxu0 0.0
        %302 = vmatpush1.xpose.msra.mxu0 0.0
        %303 = vmatprep.subr.mxu0 0.0
        %304 = vmatpush1.xpose.msra.mxu0 0.0
        %305 = vmatprep.subr.mxu0 0.0
        %306 = vmatpush1.xpose.msra.mxu0 0.0
        %307 = vmatprep.subr.mxu0 0.0
        %308 = vmatpush1.xpose.msra.mxu0 0.0
        %309 = vmatprep.subr.mxu0 0.0
        %310 = vmatpush1.xpose.msra.mxu0 0.0
        %311 = vmatprep.subr.mxu0 0.0
        %312 = vmatpush1.xpose.msra.mxu0 0.0
        %313 = vmatprep.subr.mxu0 0.0
        %314 = vmatpush1.xpose.msra.mxu0 0.0
        %315 = vmatprep.subr.mxu0 0.0
        %316 = vmatpush1.xpose.msra.mxu0 0.0
        %317 = vmatprep.subr.mxu0 0.0
        %318 = vmatpush1.xpose.msra.mxu0 0.0
        %319 = vmatprep.subr.mxu0 0.0
        %320 = vmatpush1.xpose.msra.mxu0 0.0
        %321 = vmatprep.mubr.f32.mxu0 0.0
        %322 = vmatmul.mubr.f32.gmra.mrb[0].mxu0 %v246
        %v323 = vpop.f32.mrb[0].mxu0
        %v324 = vadd.f32 0.0, %v323
        %v325 = vpop.f32.mrb[0].mxu0
        %326 = vdwg.mxu0
        %v327 = vlaneseq
        %v328 = vand.u32 %v327, 127
        %v329 = vadd.s32 %v228, %v328
        %vm330 = vcmp.lt.s32.totalorder %v329, 20
        %v331 = vsel %vm330, 1, 0
        %vm332 = vcmp.eq.s32.totalorder %v331, 1
        %v333 = vsel %vm332, %v324, -1e+30
        %v334 = vld [vmem:[#allocation3] sm:$0xff]
        %vm335 = vcmask 195584
        %v336 = vsel %vm335, %v333, -inf
        %337 = vmax.xlane.f32.xlu0 %v336
        %v338 = vpop.xlane.xlu0 %337
        %v339 = vmax.f32 %v334, %v338
        %v340 = vsub.f32 %v334, %v339
        %v341 = vmul.f32 %v340, 1.442695
        %v342 = vpow.pop %v341
        %344 = vset.pattern.permute.xlu0 0
        %345 = vperm.xlu0 %344, %v339
        %v346 = vpop.permute.xlu0 %345
        %v348 = vsub.f32 %v333, %v346
        %v349 = vmul.f32 %v348, 1.442695
        %v350 = vpow.pop %v349
        %v351 = vld [vmem:[#allocation4] sm:$0xff]
        %v352 = vmul.f32 %v342, %v351
        %v353 = vsel %vm335, %v350, 0.0
        %354 = vadd.xlane.f32.xlu0 %v353
        %v355 = vpop.xlane.xlu0 %354
        %v356 = vadd.f32 %v352, %v355
        %vm357 = vcmask 7168
        %358 = vst.msk [vmem:[#allocation4] sm:$0xff] %vm357, %v356
        %v359 = vld [vmem:[#allocation5] sm:$0xff]
        %361 = vset.pattern.permute.xlu0 0
        %362 = vperm.xlu0 %361, %v342
        %v363 = vpop.permute.xlu0 %362
        %v365 = vmul.f32 %v363, %v359
        %v367 = vsel %vm335, %v350, 0
        %369 = vmatprep.subr.mxu0 0.0
        %370 = vmatpush1.msra.mxu0 %v241
        %371 = vmatprep.subr.mxu0 0.0
        %372 = vmatpush1.msra.mxu0 %v242
        %373 = vmatprep.subr.mxu0 0.0
        %374 = vmatpush1.msra.mxu0 %v243
        %375 = vmatprep.subr.mxu0 0.0
        %376 = vmatpush1.msra.mxu0 0.0
        %377 = vmatprep.subr.mxu0 0.0
        %378 = vmatpush1.msra.mxu0 0.0
        %379 = vmatprep.subr.mxu0 0.0
        %380 = vmatpush1.msra.mxu0 0.0
        %381 = vmatprep.subr.mxu0 0.0
        %382 = vmatpush1.msra.mxu0 0.0
        %383 = vmatprep.subr.mxu0 0.0
        %384 = vmatpush1.msra.mxu0 0.0
        %385 = vmatprep.subr.mxu0 0.0
        %386 = vmatpush1.msra.mxu0 0.0
        %387 = vmatprep.subr.mxu0 0.0
        %388 = vmatpush1.msra.mxu0 0.0
        %389 = vmatprep.subr.mxu0 0.0
        %390 = vmatpush1.msra.mxu0 0.0
        %391 = vmatprep.subr.mxu0 0.0
        %392 = vmatpush1.msra.mxu0 0.0
        %393 = vmatprep.subr.mxu0 0.0
        %394 = vmatpush1.msra.mxu0 0.0
        %395 = vmatprep.subr.mxu0 0.0
        %396 = vmatpush1.msra.mxu0 0.0
        %397 = vmatprep.subr.mxu0 0.0
        %398 = vmatpush1.msra.mxu0 0.0
        %399 = vmatprep.subr.mxu0 0.0
        %400 = vmatpush1.msra.mxu0 0.0
        %401 = vmatprep.subr.mxu0 0.0
        %402 = vmatpush1.msra.mxu0 0.0
        %403 = vmatprep.subr.mxu0 0.0
        %404 = vmatpush1.msra.mxu0 0.0
        %405 = vmatprep.subr.mxu0 0.0
        %406 = vmatpush1.msra.mxu0 0.0
        %407 = vmatprep.subr.mxu0 0.0
        %408 = vmatpush1.msra.mxu0 0.0
        %409 = vmatprep.subr.mxu0 0.0
        %410 = vmatpush1.msra.mxu0 0.0
        %411 = vmatprep.subr.mxu0 0.0
        %412 = vmatpush1.msra.mxu0 0.0
        %413 = vmatprep.subr.mxu0 0.0
        %414 = vmatpush1.msra.mxu0 0.0
        %415 = vmatprep.subr.mxu0 0.0
        %416 = vmatpush1.msra.mxu0 0.0
        %417 = vmatprep.subr.mxu0 0.0
        %418 = vmatpush1.msra.mxu0 0.0
        %419 = vmatprep.subr.mxu0 0.0
        %420 = vmatpush1.msra.mxu0 0.0
        %421 = vmatprep.subr.mxu0 0.0
        %422 = vmatpush1.msra.mxu0 0.0
        %423 = vmatprep.subr.mxu0 0.0
        %424 = vmatpush1.msra.mxu0 0.0
        %425 = vmatprep.subr.mxu0 0.0
        %426 = vmatpush1.msra.mxu0 0.0
        %427 = vmatprep.subr.mxu0 0.0
        %428 = vmatpush1.msra.mxu0 0.0
        %429 = vmatprep.subr.mxu0 0.0
        %430 = vmatpush1.msra.mxu0 0.0
        %431 = vmatprep.subr.mxu0 0.0
        %432 = vmatpush1.msra.mxu0 0.0
        %433 = vmatprep.mubr.f32.mxu0 0.0
        %434 = vmatmul.mubr.f32.gmra.mrb[0].mxu0 %v367
        %v435 = vpop.f32.mrb[0].mxu0
        %v436 = vadd.f32 0.0, %v435
        %v437 = vpop.f32.mrb[0].mxu0
        %438 = vdwg.mxu0
        %v439 = vadd.f32 %v365, %v436
        %440 = vst.msk [vmem:[#allocation5] sm:$0xff] %vm244, %v439
        %441 = vst.msk [vmem:[#allocation3] sm:$0xff] %vm357, %v339
        // Predicated region
        $region33: #{tpu_custom_call.1} parent=27 // pred_check
          %p442 = pneg %p207
        $region34: #{tpu_custom_call.1} parent=27 // pred_check_branch
          %444 = sbr.rel (%p442) target = $region36
        $region35: #{tpu_custom_call.1} parent=27 // pred_region
          %v445 = vld [vmem:[#allocation4] sm:$0xff]
          %v446 = vrcp.pop %v445
          %v447 = vld [vmem:[#allocation5] sm:$0xff]
          %449 = vset.pattern.permute.xlu0 0
          %450 = vperm.xlu0 %449, %v446
          %v451 = vpop.permute.xlu0 %450
          %v453 = vmul.f32 %v447, %v451
          %454 = vst.msk [vmem:[%s189] sm:$0xff] %vm244, %v453
        $region36: #{tpu_custom_call.1} parent=27 // pred_fallthru
          _
        %s455 = sand.u32 %s101, 1
        %s456 = scalar_lea.sflag [#allocation7], %s455
        %s457 = sand.u32 %s101, 1
        %s458 = smul.addr %s457, 8
        %s459 = scalar_lea.vmem [#allocation6], %s458
        // Predicated region
        $region37: #{tpu_custom_call.1} parent=27 // pred_check
          %p460 = pneg %p111
        $region38: #{tpu_custom_call.1} parent=27 // pred_check_branch
          %462 = sbr.rel (%p460) target = $region40
        $region39: #{tpu_custom_call.1} parent=27 // pred_region
          %s464 = ssub.s32 128, 128
          %465 = vsyncadd %s456, %s464
          %s466 = sadd.s32 %s22, %s21
          %s467 = smul.addr %s466, 128
          %s468 = scalar_lea.hbm %s2, %s467
          %s470 = sshll.u32 %s459, 4
          %s471 = int_to_ptr.vmem [resolvable:$true] %s470
          %473 = dma.vmem_to_hbm [thread:$0]  %s471, 128, %s468, %s456
        $region40: #{tpu_custom_call.1} parent=27 // pred_fallthru
          _
      $region28: #{tpu_custom_call.1} parent=5 // pred_fallthru
        _
      %p474 = scmp.le.s32.totalorder 2, %s11
      // Predicated region
      $region41: #{tpu_custom_call.1} parent=5 // pred_check
        %p475 = pneg %p474
      $region42: #{tpu_custom_call.1} parent=5 // pred_check_branch
        %477 = sbr.rel (%p475) target = $region44
      $region43: #{tpu_custom_call.1} parent=5 // pred_region
        %s478 = ssub.s32 %s11, 2
        // Predicated region
        $region45: #{tpu_custom_call.1} parent=43 // pred_check
          %p479 = pneg %p117
        $region46: #{tpu_custom_call.1} parent=43 // pred_check_branch
          %481 = sbr.rel (%p479) target = $region48
        $region47: #{tpu_custom_call.1} parent=43 // pred_region
          %s482 = sand.u32 %s102, 1
          %s483 = scalar_lea.sflag [#allocation7], %s482
          %s484 = sand.u32 %s102, 1
          %s485 = smul.addr %s484, 8
          %s486 = scalar_lea.vmem [#allocation6], %s485
          %487 = dma.done %s483, 128
        $region48: #{tpu_custom_call.1} parent=43 // pred_fallthru
          _
      $region44: #{tpu_custom_call.1} parent=5 // pred_fallthru
        _
    $region6: #{tpu_custom_call.1} parent=1 // loop_footer
      %s15 = sadd.s32 1, %s11
    $region7: #{tpu_custom_call.1} parent=1 // loop_footer_branch
      %10 = sbr.rel target = $region3
    $region8: #{tpu_custom_call.1} parent=1 // loop_exit
      _
    %488 = vsyncpa [#allocation7], 1
    %s489 = scalar_lea.sflag [#allocation7], 1
    %490 = vsyncpa %s489, 1

</llo_original>
